<compile_context>
chip_gen: v6e
topology: v6e:2x2x1
jax: 0.10.0
libtpu: 0.0.40
codegen_flags: <defaults>
</compile_context>

<pallas_src>
import functools
import math

import jax
import jax.numpy as jnp
from jax.experimental import pallas as pl
from jax.experimental.pallas import tpu as pltpu


# Collapse the K grid axis (no accumulator) when padded K fits one tile.
_SINGLE_K_MAX = 2048
# Keep the whole (K, N) weight as one VMEM-resident block below this size.
_RESIDENT_W_BYTES = 4 * 1024 * 1024
_RESIDENT_N_MAX = 2048


def _round_up(x: int, m: int) -> int:
    return (x + m - 1) // m * m


def _epilogue(acc_f32, b_ref, o_ref, weight_scale, negative_slope):
    # acc_f32: (tm, tn) f32 completed matmul; b_ref: (1, tn) f32 already scaled by
    # lr_mul * sqrt(2); weight_scale already includes the sqrt(2) activation gain.
    z = acc_f32 * weight_scale + b_ref[...]
    o_ref[...] = jnp.where(z >= 0, z, z * negative_slope).astype(o_ref.dtype)


def _equal_linear_kernel_single_k(x_ref, w_ref, b_ref, o_ref, *,
                                  weight_scale, negative_slope):
    # x_ref: (tm, K)  w_ref: (K, tn)  — single MXU pass, no accumulator scratch.
    acc = jnp.dot(x_ref[...], w_ref[...], preferred_element_type=jnp.float32)
    _epilogue(acc, b_ref, o_ref, weight_scale, negative_slope)


def _equal_linear_kernel_multi_k(x_ref, w_ref, b_ref, o_ref, acc_ref, *,
                                 weight_scale, negative_slope):
    # Fallback for large K: output-stationary accumulation over the K grid axis.
    k = pl.program_id(2)

    @pl.when(k == 0)
    def _():
        acc_ref[...] = jnp.zeros_like(acc_ref)

    acc_ref[...] += jnp.dot(x_ref[...], w_ref[...],
                            preferred_element_type=jnp.float32)

    @pl.when(k == pl.num_programs(2) - 1)
    def _():
        _epilogue(acc_ref[...], b_ref, o_ref, weight_scale, negative_slope)


def equal_linear(x, weight, bias=None, *, lr_mul=1.0, negative_slope=0.2,
                 act_scale=math.sqrt(2.0), compute_dtype=jnp.bfloat16,
                 tm=256, tn=256, tk=1024,
                 resident_weight_bytes=_RESIDENT_W_BYTES):
    """x: (B, in_dim); weight: (out_dim, in_dim) (PyTorch layout); bias: (out_dim,)."""
    B, in_dim = x.shape
    out_dim, in_dim_w = weight.shape
    assert in_dim_w == in_dim
    out_dtype = x.dtype
    if compute_dtype is None:
        compute_dtype = x.dtype
    itemsize = jnp.dtype(compute_dtype).itemsize

    if bias is None:
        bias = jnp.zeros((out_dim,), dtype=jnp.float32)

    # Fold equalized-LR scale and the fused-leaky-relu gain (act_scale > 0, and
    # leaky_relu(z)*s == leaky_relu(z*s) for s > 0).  Scale uses the *logical*
    # in_dim — zero-padded K columns contribute nothing to the contraction.
    weight_scale = (1.0 / math.sqrt(in_dim)) * lr_mul * act_scale
    bias_folded = (bias.astype(jnp.float32) * (lr_mul * act_scale))

    # --- tile / padding selection -------------------------------------------
    sublane = 16 if itemsize < 4 else 8          # packed sublanes for bf16
    tm_ = min(tm, _round_up(B, sublane))
    M = _round_up(B, tm_)

    K_pad = _round_up(in_dim, 128)
    single_k = K_pad <= _SINGLE_K_MAX

    n_align = 256 if out_dim >= 256 else 128     # 256-wide MXU on v6e/v7x
    N_full = _round_up(out_dim, n_align)

    if single_k:
        tk_ = K_pad
        K = K_pad
        if (K * N_full * itemsize <= resident_weight_bytes
                and N_full <= _RESIDENT_N_MAX):
            # Whole weight is one block -> DMA'd once, resident across M tiles.
            tn_ = N_full
        else:
            tn_ = min(tn, N_full)
    else:
        tk_ = _round_up(min(tk, K_pad), 128)
        K = _round_up(in_dim, tk_)
        tn_ = min(tn, N_full)
    N = _round_up(out_dim, tn_)

    # --- operand layout: pad to lane/tile-dense shapes, weight as (K, N) -----
    # Zero padding is neutral for the matmul and for the bias add; padded rows /
    # columns are sliced off below.  (The explicit K-pad is load-bearing: implicit
    # edge blocks would feed garbage into the contraction.)
    x_p = x
    if M != B or K != in_dim:
        x_p = jnp.pad(x, ((0, M - B), (0, K - in_dim)))
    x_p = x_p.astype(compute_dtype)

    w_t = weight.T                                # (in_dim, out_dim) == (K, N) layout
    if K != in_dim or N != out_dim:
        w_t = jnp.pad(w_t, ((0, K - in_dim), (0, N - out_dim)))
    w_p = w_t.astype(compute_dtype)

    b_p = bias_folded if N == out_dim else jnp.pad(bias_folded, (0, N - out_dim))
    b2d = b_p.reshape(1, N)

    # --- pallas_call ----------------------------------------------------------
    if single_k:
        kernel = functools.partial(_equal_linear_kernel_single_k,
                                   weight_scale=weight_scale,
                                   negative_slope=negative_slope)
        grid = (M // tm_, N // tn_)
        grid_spec = pltpu.PrefetchScalarGridSpec(
            num_scalar_prefetch=0,
            grid=grid,
            in_specs=[
                pl.BlockSpec((tm_, K), lambda i, j: (i, 0)),    # x tile
                pl.BlockSpec((K, tn_), lambda i, j: (0, j)),    # weight (K, N) tile
                pl.BlockSpec((1, tn_), lambda i, j: (0, j)),    # folded bias
            ],
            out_specs=pl.BlockSpec((tm_, tn_), lambda i, j: (i, j)),
            scratch_shapes=[],
        )
        dim_sem = ("parallel", "parallel")
    else:
        kernel = functools.partial(_equal_linear_kernel_multi_k,
                                   weight_scale=weight_scale,
                                   negative_slope=negative_slope)
        grid = (M // tm_, N // tn_, K // tk_)
        grid_spec = pltpu.PrefetchScalarGridSpec(
            num_scalar_prefetch=0,
            grid=grid,
            in_specs=[
                pl.BlockSpec((tm_, tk_), lambda i, j, k: (i, k)),   # x tile
                pl.BlockSpec((tk_, tn_), lambda i, j, k: (k, j)),   # weight (K, N) tile
                pl.BlockSpec((1, tn_), lambda i, j, k: (0, j)),     # folded bias
            ],
            out_specs=pl.BlockSpec((tm_, tn_), lambda i, j, k: (i, j)),
            scratch_shapes=[pltpu.VMEM((tm_, tn_), jnp.float32)],
        )
        dim_sem = ("parallel", "parallel", "arbitrary")

    out_padded = pl.pallas_call(
        kernel,
        out_shape=jax.ShapeDtypeStruct((M, N), out_dtype),
        grid_spec=grid_spec,
        compiler_params=pltpu.CompilerParams(
            dimension_semantics=dim_sem,
            # Tiles above stay a few MiB total; 32 MiB leaves ample headroom on
            # v7x (64 MiB/TC) and is already above v5e's 16 MiB scoped default.
            vmem_limit_bytes=32 * 1024 * 1024,
        ),
    )(x_p, w_p, b2d)

    if M == B and N == out_dim:
        return out_padded
    return out_padded[:B, :out_dim]


def _reference(x, weight, bias, lr_mul=1.0, negative_slope=0.2):
    in_dim = weight.shape[1]
    scale = 1.0 / math.sqrt(in_dim) * lr_mul
    out = x @ (weight * scale).T
    out = out + bias[None, :] * lr_mul
    out = jnp.where(out >= 0, out, out * negative_slope) * math.sqrt(2.0)
    return out


if __name__ == "__main__":
    key = jax.random.PRNGKey(0)

    # Case 1: the module's shipped configuration (in_dim=32, out_dim=64, lr_mul=1,
    # bias_init=0).  Exercises the single-K resident-weight path.
    in_dim, out_dim, batch = 32, 64, 8
    lr_mul = 1.0
    k_w, k_x, key = jax.random.split(key, 3)
    weight = jax.random.normal(k_w, (out_dim, in_dim), dtype=jnp.float32) / lr_mul
    bias = jnp.zeros((out_dim,), dtype=jnp.float32)
    x = jax.random.normal(k_x, (batch, in_dim), dtype=jnp.float32)
    ref = _reference(x, weight, bias, lr_mul)

    # 1a: f32 operands -> tight check of the kernel math.
    out_f32 = jax.block_until_ready(
        equal_linear(x, weight, bias, lr_mul=lr_mul, compute_dtype=jnp.float32))
    assert out_f32.shape == (batch, out_dim)
    assert jnp.allclose(out_f32, ref, atol=1e-5, rtol=1e-5)

    # 1b: default bf16 operands (f32 accumulation) -> loosened tolerances.
    out_bf16 = jax.block_until_ready(equal_linear(x, weight, bias, lr_mul=lr_mul))
    assert out_bf16.shape == (batch, out_dim)
    assert jnp.allclose(out_bf16, ref, atol=5e-2, rtol=5e-2)

    # Case 2: larger layer, resident-weight single-K path, f32 tight check.
    in_dim2, out_dim2, batch2 = 384, 256, 48
    lr_mul2 = 0.5
    k_w2, k_x2, k_b2, key = jax.random.split(key, 4)
    weight2 = jax.random.normal(k_w2, (out_dim2, in_dim2), dtype=jnp.float32) / lr_mul2
    bias2 = jax.random.normal(k_b2, (out_dim2,), dtype=jnp.float32) * 0.1
    x2 = jax.random.normal(k_x2, (batch2, in_dim2), dtype=jnp.float32)
    ref2 = _reference(x2, weight2, bias2, lr_mul2)

    out2 = jax.block_until_ready(
        equal_linear(x2, weight2, bias2, lr_mul=lr_mul2, compute_dtype=jnp.float32))
    assert out2.shape == (batch2, out_dim2)
    assert jnp.allclose(out2, ref2, atol=1e-4, rtol=1e-4)

    # Case 3: same problem but force the streaming (tiled-N) single-K branch.
    out3 = jax.block_until_ready(
        equal_linear(x2, weight2, bias2, lr_mul=lr_mul2, compute_dtype=jnp.float32,
                     tn=128, resident_weight_bytes=0))
    assert jnp.allclose(out3, ref2, atol=1e-4, rtol=1e-4)

    # Case 4: K large enough to exercise the multi-K accumulator fallback.
    in_dim4, out_dim4, batch4 = 2304, 128, 32
    k_w4, k_x4, k_b4, key = jax.random.split(key, 4)
    weight4 = jax.random.normal(k_w4, (out_dim4, in_dim4), dtype=jnp.float32)
    bias4 = jax.random.normal(k_b4, (out_dim4,), dtype=jnp.float32) * 0.1
    x4 = jax.random.normal(k_x4, (batch4, in_dim4), dtype=jnp.float32)
    ref4 = _reference(x4, weight4, bias4, 1.0)

    out4 = jax.block_until_ready(
        equal_linear(x4, weight4, bias4, lr_mul=1.0, compute_dtype=jnp.float32))
    assert out4.shape == (batch4, out_dim4)
    assert jnp.allclose(out4, ref4, atol=2e-4, rtol=2e-4)

    print("KERNEL_OK")
</pallas_src>

<mosaic_0001>
module attributes {stable_mosaic.version = 11 : i64} {
  func.func @_equal_linear_kernel_single_k(%arg0: i32, %arg1: i32, %arg2: memref<8x128xf32, #tpu.memory_space<vmem>>, %arg3: memref<128x128xf32, #tpu.memory_space<vmem>>, %arg4: memref<1x128xf32, #tpu.memory_space<vmem>>, %arg5: memref<8x128xf32, #tpu.memory_space<vmem>>) attributes {dimension_semantics = [#tpu.dimension_semantics<parallel>, #tpu.dimension_semantics<parallel>], iteration_bounds = array<i64: 1, 1>, scalar_prefetch = 0 : i64, scratch_operands = 0 : i64, tpu.core_type = #tpu.core_type<tc>, window_params = [{transform_indices = @transform_0, window_bounds = array<i64: 8, 128>}, {transform_indices = @transform_1, window_bounds = array<i64: 128, 128>}, {transform_indices = @transform_2, window_bounds = array<i64: 1, 128>}, {transform_indices = @transform_3, window_bounds = array<i64: 8, 128>}]} {
    %c0 = arith.constant 0 : index
    %c0_0 = arith.constant 0 : index
    %0 = vector.load %arg2[%c0, %c0_0] : memref<8x128xf32, #tpu.memory_space<vmem>>, vector<8x128xf32>
    %c0_1 = arith.constant 0 : index
    %c0_2 = arith.constant 0 : index
    %1 = vector.load %arg3[%c0_1, %c0_2] : memref<128x128xf32, #tpu.memory_space<vmem>>, vector<128x128xf32>
    %cst = arith.constant dense<0.000000e+00> : vector<8x128xf32>
    %2 = tpu.matmul %0, %1, %cst {dimension_numbers = #tpu.dot_dimension_numbers<[1], [0], [0], [1], [0, 0, 1, 1], [], []>} : vector<8x128xf32>, vector<128x128xf32>, vector<8x128xf32> -> vector<8x128xf32>
    %cst_3 = arith.constant 2.500000e-01 : f32
    %3 = vector.broadcast %cst_3 : f32 to vector<8x128xf32>
    %4 = arith.mulf %2, %3 : vector<8x128xf32>
    %c0_4 = arith.constant 0 : index
    %c0_5 = arith.constant 0 : index
    %5 = vector.load %arg4[%c0_4, %c0_5] : memref<1x128xf32, #tpu.memory_space<vmem>>, vector<1x128xf32>
    %6 = vector.broadcast %5 : vector<1x128xf32> to vector<8x128xf32>
    %7 = arith.addf %4, %6 : vector<8x128xf32>
    %cst_6 = arith.constant 0.000000e+00 : f32
    %8 = vector.broadcast %cst_6 : f32 to vector<8x128xf32>
    %9 = arith.cmpf oge, %7, %8 : vector<8x128xf32>
    %cst_7 = arith.constant 2.000000e-01 : f32
    %10 = vector.broadcast %cst_7 : f32 to vector<8x128xf32>
    %11 = arith.mulf %7, %10 : vector<8x128xf32>
    %12 = arith.select %9, %7, %11 : vector<8x128xi1>, vector<8x128xf32>
    %c0_8 = arith.constant 0 : index
    %c0_9 = arith.constant 0 : index
    %13 = vector.load %arg5[%c0_8, %c0_9] : memref<8x128xf32, #tpu.memory_space<vmem>>, vector<8x128xf32>
    tpu.vector_store %arg5[%c0_8, %c0_9], %12 {strides = array<i32>} : memref<8x128xf32, #tpu.memory_space<vmem>>, vector<8x128xf32>,
    return
  }
  func.func @transform_0(%arg0: i32, %arg1: i32) -> (i32, i32) {
    %c0_i32 = arith.constant 0 : i32
    %c0_i32_0 = arith.constant 0 : i32
    return %arg0, %c0_i32 : i32, i32
  }
  func.func @transform_1(%arg0: i32, %arg1: i32) -> (i32, i32) {
    %c0_i32 = arith.constant 0 : i32
    %c0_i32_0 = arith.constant 0 : i32
    return %c0_i32, %arg1 : i32, i32
  }
  func.func @transform_2(%arg0: i32, %arg1: i32) -> (i32, i32) {
    %c0_i32 = arith.constant 0 : i32
    %c0_i32_0 = arith.constant 0 : i32
    return %c0_i32, %arg1 : i32, i32
  }
  func.func @transform_3(%arg0: i32, %arg1: i32) -> (i32, i32) {
    %c0_i32 = arith.constant 0 : i32
    return %arg0, %arg1 : i32, i32
  }
}

</mosaic_0001>

<llo_original>
// kernel: tpu_custom_call.1
$region0: #{tpu_custom_call.1}
  #allocation0 [shape = 'u32[]', space=smem, size = 0x4, offset = 0x4, fixed_abs, tag = 'smem constant byte address 0x4 - core index']
  #allocation1 [shape = 'u32[144,128]{1,0:T(1,128)}', space=vmem, size = 0x12000, scoped, tag = 'internal scratch']
  %s0 = inlined_call_operand.hbm [shape: f32[8,128], index: 0, kind: input, shape index: {}]
  %s1 = inlined_call_operand.hbm [shape: f32[128,128], index: 1, kind: input, shape index: {}]
  %s2 = inlined_call_operand.vmem [shape: f32[1,128], index: 2, kind: input, shape index: {}]
  %s3 = inlined_call_operand.hbm [shape: f32[8,128], index: 3, kind: output, shape index: {}]
  %s4 = sld [smem:[#allocation0]]
  $region30: #{tpu_custom_call.1} parent=0
    _
  %s6 = ssub.s32 1, %s4
  %s7 = scalar_select 0, %s6, %s4
  $region1: #{tpu_custom_call.1} parent=0
    #allocation2 [shape = 'u8[4096]{0}', space=vmem, size = 0x1000, scoped, tag = 'input window, operand 0, single buffered']
    #allocation3 [shape = 's32[1]{0}', space=sflag, size = 0x4, scoped, tag = 'scoped memory for tpu_custom_call.1']
    #allocation4 [shape = 's32[1]{0}', space=sflag, size = 0x4, scoped, tag = 'scoped memory for tpu_custom_call.1']
    #allocation5 [shape = 'u8[65536]{0}', space=vmem, size = 0x10000, scoped, tag = 'input window, operand 1, single buffered']
    #allocation6 [shape = 's32[1]{0}', space=sflag, size = 0x4, scoped, tag = 'scoped memory for tpu_custom_call.1']
    #allocation7 [shape = 'u8[4096]{0}', space=vmem, size = 0x1000, scoped, tag = 'output window, operand 0, single buffered']
    %8 = vsyncpa [#allocation3], 0
    %9 = vsyncpa [#allocation6], 0
    %10 = vsyncpa [#allocation4], 0
    // Predicated region
    $region2: #{tpu_custom_call.1} parent=1 // pred_check
      _
    $region3: #{tpu_custom_call.1} parent=1 // pred_check_branch
      %12 = sbr.rel (0) target = $region5
    $region4: #{tpu_custom_call.1} parent=1 // pred_region
      %s14 = ssub.s32 128, 128
      %15 = vsyncadd [#allocation3], %s14
      %s17 = sshll.u32 [#allocation2], 4
      %s18 = int_to_ptr.vmem [resolvable:$true] %s17
      %20 = dma.hbm_to_vmem [thread:$0]  %s0, 128, %s18, [#allocation3]
    $region5: #{tpu_custom_call.1} parent=1 // pred_fallthru
      _
    // Predicated region
    $region6: #{tpu_custom_call.1} parent=1 // pred_check
      _
    $region7: #{tpu_custom_call.1} parent=1 // pred_check_branch
      %22 = sbr.rel (0) target = $region9
    $region8: #{tpu_custom_call.1} parent=1 // pred_region
      %s24 = ssub.s32 2048, 2048
      %25 = vsyncadd [#allocation6], %s24
      %s26 = sshll.u32 [#allocation5], 4
      %s27 = int_to_ptr.vmem [resolvable:$true] %s26
      %32 = dma.hbm_to_vmem [thread:$0]  %s1, 2048, %s27, [#allocation6], 128, 128, 8
    $region9: #{tpu_custom_call.1} parent=1 // pred_fallthru
      _
    // Predicated region
    $region10: #{tpu_custom_call.1} parent=1 // pred_check
      _
    $region11: #{tpu_custom_call.1} parent=1 // pred_check_branch
      %34 = sbr.rel (0) target = $region13
    $region12: #{tpu_custom_call.1} parent=1 // pred_region
      _
    $region13: #{tpu_custom_call.1} parent=1 // pred_fallthru
      _
    // Predicated region
    $region14: #{tpu_custom_call.1} parent=1 // pred_check
      _
    $region15: #{tpu_custom_call.1} parent=1 // pred_check_branch
      %36 = sbr.rel (0) target = $region17
    $region16: #{tpu_custom_call.1} parent=1 // pred_region
      %37 = dma.done [#allocation3], 128
    $region17: #{tpu_custom_call.1} parent=1 // pred_fallthru
      _
    // Predicated region
    $region18: #{tpu_custom_call.1} parent=1 // pred_check
      _
    $region19: #{tpu_custom_call.1} parent=1 // pred_check_branch
      %39 = sbr.rel (0) target = $region21
    $region20: #{tpu_custom_call.1} parent=1 // pred_region
      %40 = dma.done [#allocation6], 2048
    $region21: #{tpu_custom_call.1} parent=1 // pred_fallthru
      _
    %v41 = vld [vmem:[#allocation2] sm:$0xff]
    %v42 = vld [vmem:[#allocation5] sm:$0xff]
    %v43 = vld [vmem:[#allocation5 + $0x8] sm:$0xff]
    %v44 = vld [vmem:[#allocation5 + $0x10] sm:$0xff]
    %v45 = vld [vmem:[#allocation5 + $0x18] sm:$0xff]
    %v46 = vld [vmem:[#allocation5 + $0x20] sm:$0xff]
    %v47 = vld [vmem:[#allocation5 + $0x28] sm:$0xff]
    %v48 = vld [vmem:[#allocation5 + $0x30] sm:$0xff]
    %v49 = vld [vmem:[#allocation5 + $0x38] sm:$0xff]
    %v50 = vld [vmem:[#allocation5 + $0x40] sm:$0xff]
    %v51 = vld [vmem:[#allocation5 + $0x48] sm:$0xff]
    %v52 = vld [vmem:[#allocation5 + $0x50] sm:$0xff]
    %v53 = vld [vmem:[#allocation5 + $0x58] sm:$0xff]
    %v54 = vld [vmem:[#allocation5 + $0x60] sm:$0xff]
    %v55 = vld [vmem:[#allocation5 + $0x68] sm:$0xff]
    %v56 = vld [vmem:[#allocation5 + $0x70] sm:$0xff]
    %v57 = vld [vmem:[#allocation5 + $0x78] sm:$0xff]
    %58 = vmatprep.subr.mxu0 0.0
    %59 = vmatpush1.msra.mxu0 %v57
    %60 = vmatprep.subr.mxu0 0.0
    %61 = vmatpush1.msra.mxu0 %v56
    %62 = vmatprep.subr.mxu0 0.0
    %63 = vmatpush1.msra.mxu0 %v55
    %64 = vmatprep.subr.mxu0 0.0
    %65 = vmatpush1.msra.mxu0 %v54
    %66 = vmatprep.subr.mxu0 0.0
    %67 = vmatpush1.msra.mxu0 %v53
    %68 = vmatprep.subr.mxu0 0.0
    %69 = vmatpush1.msra.mxu0 %v52
    %70 = vmatprep.subr.mxu0 0.0
    %71 = vmatpush1.msra.mxu0 %v51
    %72 = vmatprep.subr.mxu0 0.0
    %73 = vmatpush1.msra.mxu0 %v50
    %74 = vmatprep.subr.mxu0 0.0
    %75 = vmatpush1.msra.mxu0 %v49
    %76 = vmatprep.subr.mxu0 0.0
    %77 = vmatpush1.msra.mxu0 %v48
    %78 = vmatprep.subr.mxu0 0.0
    %79 = vmatpush1.msra.mxu0 %v47
    %80 = vmatprep.subr.mxu0 0.0
    %81 = vmatpush1.msra.mxu0 %v46
    %82 = vmatprep.subr.mxu0 0.0
    %83 = vmatpush1.msra.mxu0 %v45
    %84 = vmatprep.subr.mxu0 0.0
    %85 = vmatpush1.msra.mxu0 %v44
    %86 = vmatprep.subr.mxu0 0.0
    %87 = vmatpush1.msra.mxu0 %v43
    %88 = vmatprep.subr.mxu0 0.0
    %89 = vmatpush1.msra.mxu0 %v42
    %90 = vmatprep.subr.mxu0 0.0
    %91 = vmatpush2.msra.mxu0 0.0
    %92 = vmatprep.subr.mxu0 0.0
    %93 = vmatpush2.msra.mxu0 0.0
    %94 = vmatprep.subr.mxu0 0.0
    %95 = vmatpush2.msra.mxu0 0.0
    %96 = vmatprep.subr.mxu0 0.0
    %97 = vmatpush2.msra.mxu0 0.0
    %98 = vmatprep.subr.mxu0 0.0
    %99 = vmatpush2.msra.mxu0 0.0
    %100 = vmatprep.subr.mxu0 0.0
    %101 = vmatpush2.msra.mxu0 0.0
    %102 = vmatprep.subr.mxu0 0.0
    %103 = vmatpush2.msra.mxu0 0.0
    %104 = vmatprep.subr.mxu0 0.0
    %105 = vmatpush2.msra.mxu0 0.0
    %106 = vmatprep.subr.mxu0 0.0
    %107 = vmatpush2.msra.mxu0 0.0
    %108 = vmatprep.subr.mxu0 0.0
    %109 = vmatpush2.msra.mxu0 0.0
    %110 = vmatprep.subr.mxu0 0.0
    %111 = vmatpush2.msra.mxu0 0.0
    %112 = vmatprep.subr.mxu0 0.0
    %113 = vmatpush2.msra.mxu0 0.0
    %114 = vmatprep.subr.mxu0 0.0
    %115 = vmatpush2.msra.mxu0 0.0
    %116 = vmatprep.subr.mxu0 0.0
    %117 = vmatpush2.msra.mxu0 0.0
    %118 = vmatprep.subr.mxu0 0.0
    %119 = vmatpush2.msra.mxu0 0.0
    %120 = vmatprep.subr.mxu0 0.0
    %121 = vmatpush2.msra.mxu0 0.0
    %122 = vmatprep.mubr.f32.mxu0 0.0
    %123 = vmatmul.mubr.f32.gmra.mxu0 %v41
    %v124 = vpop.f32.mrf.mxu0
    %v125 = vadd.f32 0.0, %v124
    %v126 = vpop.f32.mrf.mxu0
    %127 = vdwg.mxu0
    %v128 = vmul.f32 %v125, 0.25
    %v129 = vld [vmem:[%s2] sm:$0x1]
    %v131 = vlaneseq
    %v132 = vshrl.u32 %v131, 7
    %v133 = vsub.s32 0, %v132
    %v134 = vrot.slane %v129, %v133
    %v136 = vadd.f32 %v128, %v134
    %vm137 = vcmp.ge.f32.partialorder %v136, 0.0
    %v138 = vmul.f32 %v136, 0.2
    %v139 = vsel %vm137, %v136, %v138
    %140 = vst [vmem:[#allocation7] sm:$0xff] %v139
    // Predicated region
    $region22: #{tpu_custom_call.1} parent=1 // pred_check
      _
    $region23: #{tpu_custom_call.1} parent=1 // pred_check_branch
      %142 = sbr.rel (0) target = $region25
    $region24: #{tpu_custom_call.1} parent=1 // pred_region
      %s144 = ssub.s32 128, 128
      %145 = vsyncadd [#allocation4], %s144
      %s147 = sshll.u32 [#allocation7], 4
      %s148 = int_to_ptr.vmem [resolvable:$true] %s147
      %150 = dma.vmem_to_hbm [thread:$0]  %s148, 128, %s3, [#allocation4]
    $region25: #{tpu_custom_call.1} parent=1 // pred_fallthru
      _
    // Predicated region
    $region26: #{tpu_custom_call.1} parent=1 // pred_check
      _
    $region27: #{tpu_custom_call.1} parent=1 // pred_check_branch
      %152 = sbr.rel (0) target = $region29
    $region28: #{tpu_custom_call.1} parent=1 // pred_region
      %153 = dma.done [#allocation4], 128
    $region29: #{tpu_custom_call.1} parent=1 // pred_fallthru
      _
    %154 = vsyncpa [#allocation3], 1
    %155 = vsyncpa [#allocation6], 1
    %156 = vsyncpa [#allocation4], 1

</llo_original>
